<compile_context>
chip_gen: v6e
topology: v6e:2x2x1
jax: 0.10.0
libtpu: 0.0.40
codegen_flags: <defaults>
</compile_context>

<pallas_src>
import functools

import jax
import jax.numpy as jnp
from jax.experimental import pallas as pl
from jax.experimental.pallas import tpu as pltpu

_LANE = 128


def _round_up(x: int, m: int) -> int:
    return (x + m - 1) // m * m


def _gatednet_kernel(n_out, x_ref, wh_ref, bh_ref, wo_ref, bo_ref, y_ref, xpad_ref):
    tb, n_f = x_ref.shape
    f_pad = xpad_ref.shape[1]

    # Pad the contraction dim to f_pad inside VMEM (zero columns match the zero rows
    # appended to W_h) instead of materializing a padded copy of x in HBM.
    if f_pad > n_f:
        xpad_ref[...] = jnp.zeros_like(xpad_ref)
    xpad_ref[:, :n_f] = x_ref[...].astype(jnp.bfloat16)

    # Hidden layer: bf16 MXU operands, f32 accumulation, f32 epilogue (v5e-friendly).
    h = jnp.dot(xpad_ref[...], wh_ref[...],
                preferred_element_type=jnp.float32) + bh_ref[...]
    h = jnp.maximum(h, 0.0)  # ReLU in f32

    # Output layer: lane-aligned matmul (o_pad = 128), then slice to the real n_out so
    # only a (tb, n_out) block is written back to HBM (no padded output stream).
    y = jnp.dot(h.astype(jnp.bfloat16), wo_ref[...],
                preferred_element_type=jnp.float32) + bo_ref[...]
    y_ref[...] = y[:, :n_out].astype(y_ref.dtype)


def prepare_params(w_h, b_h, w_o, b_o):
    """One-time pad + bf16 cast of the parameters (hoisted out of the per-call path).

    Zero padding is exact for this network: zero weight rows/cols and zero biases
    contribute nothing, and relu(0) = 0 keeps padded hidden units inert.
    """
    n_features, n_hidden = w_h.shape
    n_out = w_o.shape[1]
    f_pad = _round_up(n_features, 16)    # bf16 sublane granule for W_h's second-minor dim
    h_pad = _round_up(n_hidden, _LANE)   # lane-dense hidden acts / K of matmul 2
    o_pad = _round_up(n_out, _LANE)      # lane-aligned N for matmul 2 (sliced before store)

    w_h_p = (jnp.zeros((f_pad, h_pad), jnp.bfloat16)
             .at[:n_features, :n_hidden].set(w_h.astype(jnp.bfloat16)))
    b_h_p = jnp.zeros((1, h_pad), jnp.float32).at[0, :n_hidden].set(b_h)
    w_o_p = (jnp.zeros((h_pad, o_pad), jnp.bfloat16)
             .at[:n_hidden, :n_out].set(w_o.astype(jnp.bfloat16)))
    b_o_p = jnp.zeros((1, o_pad), jnp.float32).at[0, :n_out].set(b_o)
    return w_h_p, b_h_p, w_o_p, b_o_p


@functools.partial(jax.jit, static_argnames=("n_out", "tile_b"))
def gatednet_forward(x, w_h_p, b_h_p, w_o_p, b_o_p, *, n_out, tile_b=1024):
    """Fused Gatednet forward on pre-padded params. x: (B, n_features) f32 -> (B, n_out) f32."""
    batch, n_features = x.shape
    f_pad = w_h_p.shape[0]

    # Batch tile: large enough to amortize per-step overhead, multiple of 8 sublanes.
    tb = min(tile_b, _round_up(batch, 8))
    # v7x megacore: guarantee >= 2 grid steps (both TensorCores busy) whenever the
    # batch is big enough to be worth splitting.
    if batch > 8 and pl.cdiv(batch, tb) < 2:
        tb = _round_up(pl.cdiv(batch, 2), 8)
    grid = (pl.cdiv(batch, tb),)   # ragged last tile handled by Pallas (no batch padding)

    # Weights/biases: full-array blocks with constant index_maps -> VMEM-resident,
    # no per-step re-DMA.
    resident = lambda a: pl.BlockSpec(a.shape, lambda i: (0, 0))

    kernel = functools.partial(_gatednet_kernel, n_out)

    return pl.pallas_call(
        kernel,
        out_shape=jax.ShapeDtypeStruct((batch, n_out), jnp.float32),
        grid=grid,
        in_specs=[
            pl.BlockSpec((tb, n_features), lambda i: (i, 0)),   # x: batch-tiled, unpadded
            resident(w_h_p),
            resident(b_h_p),
            resident(w_o_p),
            resident(b_o_p),
        ],
        out_specs=pl.BlockSpec((tb, n_out), lambda i: (i, 0)),  # unpadded output stream
        scratch_shapes=[pltpu.VMEM((tb, f_pad), jnp.bfloat16)],  # in-VMEM K padding of x
        compiler_params=pltpu.CompilerParams(
            dimension_semantics=("parallel",),   # megacore-shard the batch axis (v7x)
            vmem_limit_bytes=32 * 1024 * 1024,   # safe headroom on v7x's 64 MiB VMEM
        ),
    )(x, w_h_p, b_h_p, w_o_p, b_o_p)


def init_params(key, n_features, n_hidden, n_out, weight_init=0.1):
    """Deterministic parameter construction mirroring Gatednet.__init__."""
    k1, k2 = jax.random.split(key)
    w_hin = jax.random.normal(k1, (n_features - 2, n_hidden), jnp.float32) * weight_init
    # W_hc = ones(2, n_hidden); W_hc[0, 0::2] *= -1; W_hc[1, 1::2] *= -1
    cols = jnp.arange(n_hidden)
    w_hc = jnp.stack(
        [jnp.where(cols % 2 == 0, -1.0, 1.0),
         jnp.where(cols % 2 == 1, -1.0, 1.0)]
    ).astype(jnp.float32)
    w_h = jnp.concatenate((w_hin, w_hc), axis=0)                 # (n_features, n_hidden)
    b_h = jnp.zeros((n_hidden,), jnp.float32)
    w_o = jax.random.normal(k2, (n_hidden, n_out), jnp.float32) * weight_init
    b_o = jnp.zeros((n_out,), jnp.float32)
    return w_h, b_h, w_o, b_o


def reference_forward(x, w_h, b_h, w_o, b_o):
    y_h = jax.nn.relu(x @ w_h + b_h)
    return y_h @ w_o + b_o


if __name__ == "__main__":
    # Small shapes consistent with the module (hebbcl-style: 27 features incl. 2 ctx units).
    batch, n_features, n_hidden, n_out = 8, 27, 32, 2

    key = jax.random.PRNGKey(0)
    k_params, k_x = jax.random.split(key)
    w_h, b_h, w_o, b_o = init_params(k_params, n_features, n_hidden, n_out)
    x = jax.random.normal(k_x, (batch, n_features), jnp.float32)

    padded = prepare_params(w_h, b_h, w_o, b_o)   # one-time: pad + bf16-cast parameters
    y = gatednet_forward(x, *padded, n_out=n_out)
    y = jax.block_until_ready(y)

    y_ref = reference_forward(x, w_h, b_h, w_o, b_o)
    assert y.shape == (batch, n_out)
    # bf16 MXU operands -> compare to the f32 reference with a bf16-appropriate tolerance.
    assert jnp.allclose(y, y_ref, atol=2e-2, rtol=2e-2), "mismatch vs pure-JAX reference"

    print("KERNEL_OK")
</pallas_src>

<mosaic_0001>
module attributes {stable_mosaic.version = 11 : i64} {
  func.func @_gatednet_kernel(%arg0: i32, %arg1: memref<8x27xf32, #tpu.memory_space<vmem>>, %arg2: memref<32x128xbf16, #tpu.memory_space<vmem>>, %arg3: memref<1x128xf32, #tpu.memory_space<vmem>>, %arg4: memref<128x128xbf16, #tpu.memory_space<vmem>>, %arg5: memref<1x128xf32, #tpu.memory_space<vmem>>, %arg6: memref<8x2xf32, #tpu.memory_space<vmem>>, %arg7: memref<8x32xbf16, #tpu.memory_space<vmem>>) attributes {dimension_semantics = [#tpu.dimension_semantics<parallel>], iteration_bounds = array<i64: 1>, scalar_prefetch = 0 : i64, scratch_operands = 1 : i64, tpu.core_type = #tpu.core_type<tc>, window_params = [{transform_indices = @transform_0, window_bounds = array<i64: 8, 27>}, {pipeline_mode = #tpu.pipeline_mode<synchronous>, transform_indices = @transform_1, window_bounds = array<i64: 32, 128>}, {pipeline_mode = #tpu.pipeline_mode<synchronous>, transform_indices = @transform_2, window_bounds = array<i64: 1, 128>}, {pipeline_mode = #tpu.pipeline_mode<synchronous>, transform_indices = @transform_3, window_bounds = array<i64: 128, 128>}, {pipeline_mode = #tpu.pipeline_mode<synchronous>, transform_indices = @transform_4, window_bounds = array<i64: 1, 128>}, {transform_indices = @transform_5, window_bounds = array<i64: 8, 2>}]} {
    %cst = arith.constant 0.000000e+00 : bf16
    %0 = vector.broadcast %cst : bf16 to vector<8x32xbf16>
    %c0 = arith.constant 0 : index
    %c0_0 = arith.constant 0 : index
    %1 = vector.load %arg7[%c0, %c0_0] : memref<8x32xbf16, #tpu.memory_space<vmem>>, vector<8x32xbf16>
    tpu.vector_store %arg7[%c0, %c0_0], %0 {strides = array<i32>} : memref<8x32xbf16, #tpu.memory_space<vmem>>, vector<8x32xbf16>,
    %c0_1 = arith.constant 0 : index
    %c0_2 = arith.constant 0 : index
    %2 = vector.load %arg1[%c0_1, %c0_2] : memref<8x27xf32, #tpu.memory_space<vmem>>, vector<8x27xf32>
    %3 = arith.truncf %2 : vector<8x27xf32> to vector<8x27xbf16>
    %c0_3 = arith.constant 0 : index
    %c0_4 = arith.constant 0 : index
    %4 = vector.load %arg7[%c0_3, %c0_4] : memref<8x32xbf16, #tpu.memory_space<vmem>>, vector<8x27xbf16>
    tpu.vector_store %arg7[%c0_3, %c0_4], %3 {strides = array<i32>} : memref<8x32xbf16, #tpu.memory_space<vmem>>, vector<8x27xbf16>,
    %c0_5 = arith.constant 0 : index
    %c0_6 = arith.constant 0 : index
    %5 = vector.load %arg7[%c0_5, %c0_6] : memref<8x32xbf16, #tpu.memory_space<vmem>>, vector<8x32xbf16>
    %c0_7 = arith.constant 0 : index
    %c0_8 = arith.constant 0 : index
    %6 = vector.load %arg2[%c0_7, %c0_8] : memref<32x128xbf16, #tpu.memory_space<vmem>>, vector<32x128xbf16>
    %cst_9 = arith.constant dense<0.000000e+00> : vector<8x128xf32>
    %7 = tpu.matmul %5, %6, %cst_9 {dimension_numbers = #tpu.dot_dimension_numbers<[1], [0], [0], [1], [0, 0, 1, 1], [], []>} : vector<8x32xbf16>, vector<32x128xbf16>, vector<8x128xf32> -> vector<8x128xf32>
    %c0_10 = arith.constant 0 : index
    %c0_11 = arith.constant 0 : index
    %8 = vector.load %arg3[%c0_10, %c0_11] : memref<1x128xf32, #tpu.memory_space<vmem>>, vector<1x128xf32>
    %9 = vector.broadcast %8 : vector<1x128xf32> to vector<8x128xf32>
    %10 = arith.addf %7, %9 : vector<8x128xf32>
    %cst_12 = arith.constant 0.000000e+00 : f32
    %11 = vector.broadcast %cst_12 : f32 to vector<8x128xf32>
    %12 = arith.maximumf %10, %11 : vector<8x128xf32>
    %13 = arith.truncf %12 : vector<8x128xf32> to vector<8x128xbf16>
    %c0_13 = arith.constant 0 : index
    %c0_14 = arith.constant 0 : index
    %14 = vector.load %arg4[%c0_13, %c0_14] : memref<128x128xbf16, #tpu.memory_space<vmem>>, vector<128x128xbf16>
    %cst_15 = arith.constant dense<0.000000e+00> : vector<8x128xf32>
    %15 = tpu.matmul %13, %14, %cst_15 {dimension_numbers = #tpu.dot_dimension_numbers<[1], [0], [0], [1], [0, 0, 1, 1], [], []>} : vector<8x128xbf16>, vector<128x128xbf16>, vector<8x128xf32> -> vector<8x128xf32>
    %c0_16 = arith.constant 0 : index
    %c0_17 = arith.constant 0 : index
    %16 = vector.load %arg5[%c0_16, %c0_17] : memref<1x128xf32, #tpu.memory_space<vmem>>, vector<1x128xf32>
    %17 = vector.broadcast %16 : vector<1x128xf32> to vector<8x128xf32>
    %18 = arith.addf %15, %17 : vector<8x128xf32>
    %19 = vector.extract_strided_slice %18 {offsets = [0, 0], sizes = [8, 2], strides = [1, 1]} : vector<8x128xf32> to vector<8x2xf32>
    %c0_18 = arith.constant 0 : index
    %c0_19 = arith.constant 0 : index
    %20 = vector.load %arg6[%c0_18, %c0_19] : memref<8x2xf32, #tpu.memory_space<vmem>>, vector<8x2xf32>
    tpu.vector_store %arg6[%c0_18, %c0_19], %19 {strides = array<i32>} : memref<8x2xf32, #tpu.memory_space<vmem>>, vector<8x2xf32>,
    return
  }
  func.func @transform_0(%arg0: i32) -> (i32, i32) {
    %c0_i32 = arith.constant 0 : i32
    %c0_i32_0 = arith.constant 0 : i32
    return %arg0, %c0_i32 : i32, i32
  }
  func.func @transform_1(%arg0: i32) -> (i32, i32) {
    %c0_i32 = arith.constant 0 : i32
    %c0_i32_0 = arith.constant 0 : i32
    %c0_i32_1 = arith.constant 0 : i32
    return %c0_i32, %c0_i32_0 : i32, i32
  }
  func.func @transform_2(%arg0: i32) -> (i32, i32) {
    %c0_i32 = arith.constant 0 : i32
    %c0_i32_0 = arith.constant 0 : i32
    %c0_i32_1 = arith.constant 0 : i32
    return %c0_i32, %c0_i32_0 : i32, i32
  }
  func.func @transform_3(%arg0: i32) -> (i32, i32) {
    %c0_i32 = arith.constant 0 : i32
    %c0_i32_0 = arith.constant 0 : i32
    %c0_i32_1 = arith.constant 0 : i32
    return %c0_i32, %c0_i32_0 : i32, i32
  }
  func.func @transform_4(%arg0: i32) -> (i32, i32) {
    %c0_i32 = arith.constant 0 : i32
    %c0_i32_0 = arith.constant 0 : i32
    %c0_i32_1 = arith.constant 0 : i32
    return %c0_i32, %c0_i32_0 : i32, i32
  }
  func.func @transform_5(%arg0: i32) -> (i32, i32) {
    %c0_i32 = arith.constant 0 : i32
    %c0_i32_0 = arith.constant 0 : i32
    return %arg0, %c0_i32 : i32, i32
  }
}

</mosaic_0001>

<llo_original>
// kernel: gatednet_forward.1
$region0: #{gatednet_forward.1}
  #allocation0 [shape = 'u32[]', space=smem, size = 0x4, offset = 0x4, fixed_abs, tag = 'smem constant byte address 0x4 - core index']
  #allocation1 [shape = 'u32[144,128]{1,0:T(1,128)}', space=vmem, size = 0x12000, scoped, tag = 'internal scratch']
  #allocation2 [shape = 'bf16[8,32]{1,0:T(8,128)(2,1)}', space=vmem, size = 0x800, scoped, tag = 'scratch operand']
  %s0 = inlined_call_operand.hbm [shape: f32[8,27], index: 0, kind: input, shape index: {}]
  %s1 = inlined_call_operand.hbm [shape: bf16[32,128], index: 1, kind: input, shape index: {}]
  %s2 = inlined_call_operand.vmem [shape: f32[1,128], index: 2, kind: input, shape index: {}]
  %s3 = inlined_call_operand.hbm [shape: bf16[128,128], index: 3, kind: input, shape index: {}]
  %s4 = inlined_call_operand.vmem [shape: f32[1,128], index: 4, kind: input, shape index: {}]
  %s5 = inlined_call_operand.vmem [shape: f32[8,2], index: 5, kind: output, shape index: {}]
  %s6 = sld [smem:[#allocation0]]
  $region42: #{gatednet_forward.1} parent=0
    _
  %s8 = ssub.s32 1, %s6
  %s9 = scalar_select 0, %s8, %s6
  $region1: #{gatednet_forward.1} parent=0
    #allocation3 [shape = 'u8[4096]{0}', space=vmem, size = 0x1000, scoped, tag = 'input window, operand 0, single buffered']
    #allocation4 [shape = 's32[1]{0}', space=sflag, size = 0x4, scoped, tag = 'scoped memory for gatednet_forward.1']
    #allocation5 [shape = 'u8[8192]{0}', space=vmem, size = 0x2000, scoped, tag = 'input window, operand 1, single buffered']
    #allocation6 [shape = 's32[1]{0}', space=sflag, size = 0x4, scoped, tag = 'scoped memory for gatednet_forward.1']
    #allocation7 [shape = 'u8[32768]{0}', space=vmem, size = 0x8000, scoped, tag = 'input window, operand 3, single buffered']
    %10 = vsyncpa [#allocation4], 0
    %11 = vsyncpa [#allocation6], 0
    // Predicated region
    $region2: #{gatednet_forward.1} parent=1 // pred_check
      _
    $region3: #{gatednet_forward.1} parent=1 // pred_check_branch
      %13 = sbr.rel (0) target = $region5
    $region4: #{gatednet_forward.1} parent=1 // pred_region
      %s15 = ssub.s32 128, 128
      %16 = vsyncadd [#allocation4], %s15
      %s18 = sshll.u32 [#allocation3], 4
      %s19 = int_to_ptr.vmem [resolvable:$true] %s18
      %21 = dma.hbm_to_vmem [thread:$0]  %s0, 128, %s19, [#allocation4]
    $region5: #{gatednet_forward.1} parent=1 // pred_fallthru
      _
    // Predicated region
    $region6: #{gatednet_forward.1} parent=1 // pred_check
      _
    $region7: #{gatednet_forward.1} parent=1 // pred_check_branch
      %23 = sbr.rel (0) target = $region9
    $region8: #{gatednet_forward.1} parent=1 // pred_region
      %s25 = ssub.s32 256, 256
      %26 = vsyncadd [#allocation6], %s25
      %s27 = sshll.u32 [#allocation5], 4
      %s28 = int_to_ptr.vmem [resolvable:$true] %s27
      %33 = dma.hbm_to_vmem [thread:$0]  %s1, 256, %s28, [#allocation6], 64, 64, 4
    $region9: #{gatednet_forward.1} parent=1 // pred_fallthru
      _
    // Predicated region
    $region10: #{gatednet_forward.1} parent=1 // pred_check
      _
    $region11: #{gatednet_forward.1} parent=1 // pred_check_branch
      %35 = sbr.rel (0) target = $region13
    $region12: #{gatednet_forward.1} parent=1 // pred_region
      _
    $region13: #{gatednet_forward.1} parent=1 // pred_fallthru
      _
    // Predicated region
    $region14: #{gatednet_forward.1} parent=1 // pred_check
      _
    $region15: #{gatednet_forward.1} parent=1 // pred_check_branch
      %37 = sbr.rel (0) target = $region17
    $region16: #{gatednet_forward.1} parent=1 // pred_region
      %s39 = ssub.s32 1024, 1024
      %40 = vsyncadd [#allocation6], %s39
      %s41 = sshll.u32 [#allocation7], 4
      %s42 = int_to_ptr.vmem [resolvable:$true] %s41
      %47 = dma.hbm_to_vmem [thread:$0]  %s3, 1024, %s42, [#allocation6], 64, 64, 4
    $region17: #{gatednet_forward.1} parent=1 // pred_fallthru
      _
    // Predicated region
    $region18: #{gatednet_forward.1} parent=1 // pred_check
      _
    $region19: #{gatednet_forward.1} parent=1 // pred_check_branch
      %49 = sbr.rel (0) target = $region21
    $region20: #{gatednet_forward.1} parent=1 // pred_region
      _
    $region21: #{gatednet_forward.1} parent=1 // pred_fallthru
      _
    // Predicated region
    $region22: #{gatednet_forward.1} parent=1 // pred_check
      _
    $region23: #{gatednet_forward.1} parent=1 // pred_check_branch
      %51 = sbr.rel (0) target = $region25
    $region24: #{gatednet_forward.1} parent=1 // pred_region
      %52 = dma.done [#allocation4], 128
    $region25: #{gatednet_forward.1} parent=1 // pred_fallthru
      _
    // Predicated region
    $region26: #{gatednet_forward.1} parent=1 // pred_check
      _
    $region27: #{gatednet_forward.1} parent=1 // pred_check_branch
      %54 = sbr.rel (0) target = $region29
    $region28: #{gatednet_forward.1} parent=1 // pred_region
      %55 = dma.done [#allocation6], 256
    $region29: #{gatednet_forward.1} parent=1 // pred_fallthru
      _
    // Predicated region
    $region30: #{gatednet_forward.1} parent=1 // pred_check
      _
    $region31: #{gatednet_forward.1} parent=1 // pred_check_branch
      %57 = sbr.rel (0) target = $region33
    $region32: #{gatednet_forward.1} parent=1 // pred_region
      %58 = dma.done [#allocation6], 1024
    $region33: #{gatednet_forward.1} parent=1 // pred_fallthru
      _
    %vm60 = vcmask 257024
    %61 = vst.msk [vmem:[#allocation2] sm:$0xf] %vm60, 0
    %v62 = vld [vmem:[#allocation3] sm:$0xff]
    %v63 = vpack.c.bf16 %v62, %v62
    %vm64 = vcmask 216064
    %65 = vst.msk [vmem:[#allocation2] sm:$0xf] %vm64, %v63
    %v66 = vld [vmem:[#allocation2] sm:$0xf]
    %v67 = vld [vmem:[#allocation5] sm:$0xf]
    %v68 = vld [vmem:[#allocation5 + $0x4] sm:$0xf]
    %v69 = vld [vmem:[#allocation5 + $0x8] sm:$0xf]
    %v70 = vld [vmem:[#allocation5 + $0xc] sm:$0xf]
    %v71 = vld [vmem:[%s2] sm:$0x1]
    %v73 = vlaneseq
    %v74 = vshrl.u32 %v73, 7
    %v75 = vsub.s32 0, %v74
    %v76 = vrot.slane %v71, %v75
    %v82 = vunpack.c.l.b16 %v67
    %v83 = vunpack.c.l.b16 %v68
    %v84 = vunpack.c.l.b16 %v69
    %v85 = vunpack.c.l.b16 %v70
    %v86 = vpack.c.b16 %v83, %v82
    %v87 = vpack.c.b16 %v85, %v84
    %vm90 = vcmask 261120
    %v92 = vsel %vm90, %v66, 0
    %94 = vmatprep.subr.bf16.mxu0 0
    %95 = vmatpush1.bf16.msra.mxu0 0
    %96 = vmatprep.subr.bf16.mxu0 0
    %97 = vmatpush1.bf16.msra.mxu0 0
    %98 = vmatprep.subr.bf16.mxu0 0
    %99 = vmatpush1.bf16.msra.mxu0 0
    %100 = vmatprep.subr.bf16.mxu0 0
    %101 = vmatpush1.bf16.msra.mxu0 0
    %102 = vmatprep.subr.bf16.mxu0 0
    %103 = vmatpush1.bf16.msra.mxu0 0
    %104 = vmatprep.subr.bf16.mxu0 0
    %105 = vmatpush1.bf16.msra.mxu0 0
    %106 = vmatprep.subr.bf16.mxu0 0
    %107 = vmatpush1.bf16.msra.mxu0 %v87
    %108 = vmatprep.subr.bf16.mxu0 0
    %109 = vmatpush1.bf16.msra.mxu0 %v86
    %110 = vmatprep.subr.bf16.mxu0 0
    %111 = vmatpush2.bf16.msra.mxu0 0
    %112 = vmatprep.subr.bf16.mxu0 0
    %113 = vmatpush2.bf16.msra.mxu0 0
    %114 = vmatprep.subr.bf16.mxu0 0
    %115 = vmatpush2.bf16.msra.mxu0 0
    %116 = vmatprep.subr.bf16.mxu0 0
    %117 = vmatpush2.bf16.msra.mxu0 0
    %118 = vmatprep.subr.bf16.mxu0 0
    %119 = vmatpush2.bf16.msra.mxu0 0
    %120 = vmatprep.subr.bf16.mxu0 0
    %121 = vmatpush2.bf16.msra.mxu0 0
    %122 = vmatprep.subr.bf16.mxu0 0
    %123 = vmatpush2.bf16.msra.mxu0 0
    %124 = vmatprep.subr.bf16.mxu0 0
    %125 = vmatpush2.bf16.msra.mxu0 0
    %126 = vmatprep.mubr.bf16.mxu0 0
    %127 = vmatmul.mubr.bf16.gmra.mxu0 %v92
    %v128 = vpop.f32.mrf.mxu0
    %v129 = vadd.f32 %v76, %v128
    %v130 = vpop.f32.mrf.mxu0
    %v131 = vpop.f32.mrf.mxu0
    %v132 = vpop.f32.mrf.mxu0
    %133 = vdwg.mxu0
    %v134 = vmax.f32 %v129, 0.0
    %v135 = vpack.c.bf16 %v134, %v134
    %v136 = vld [vmem:[#allocation7] sm:$0xf]
    %v137 = vld [vmem:[#allocation7 + $0x4] sm:$0xf]
    %v138 = vld [vmem:[#allocation7 + $0x8] sm:$0xf]
    %v139 = vld [vmem:[#allocation7 + $0xc] sm:$0xf]
    %v140 = vld [vmem:[#allocation7 + $0x10] sm:$0xf]
    %v141 = vld [vmem:[#allocation7 + $0x14] sm:$0xf]
    %v142 = vld [vmem:[#allocation7 + $0x18] sm:$0xf]
    %v143 = vld [vmem:[#allocation7 + $0x1c] sm:$0xf]
    %v144 = vld [vmem:[#allocation7 + $0x20] sm:$0xf]
    %v145 = vld [vmem:[#allocation7 + $0x24] sm:$0xf]
    %v146 = vld [vmem:[#allocation7 + $0x28] sm:$0xf]
    %v147 = vld [vmem:[#allocation7 + $0x2c] sm:$0xf]
    %v148 = vld [vmem:[#allocation7 + $0x30] sm:$0xf]
    %v149 = vld [vmem:[#allocation7 + $0x34] sm:$0xf]
    %v150 = vld [vmem:[#allocation7 + $0x38] sm:$0xf]
    %v151 = vld [vmem:[#allocation7 + $0x3c] sm:$0xf]
    %v152 = vld [vmem:[%s4] sm:$0x1]
    %v154 = vlaneseq
    %v155 = vshrl.u32 %v154, 7
    %v156 = vsub.s32 0, %v155
    %v157 = vrot.slane %v152, %v156
    %v175 = vunpack.c.l.b16 %v136
    %v176 = vunpack.c.l.b16 %v137
    %v177 = vunpack.c.l.b16 %v138
    %v178 = vunpack.c.l.b16 %v139
    %v179 = vunpack.c.l.b16 %v140
    %v180 = vunpack.c.l.b16 %v141
    %v181 = vunpack.c.l.b16 %v142
    %v182 = vunpack.c.l.b16 %v143
    %v183 = vunpack.c.l.b16 %v144
    %v184 = vunpack.c.l.b16 %v145
    %v185 = vunpack.c.l.b16 %v146
    %v186 = vunpack.c.l.b16 %v147
    %v187 = vunpack.c.l.b16 %v148
    %v188 = vunpack.c.l.b16 %v149
    %v189 = vunpack.c.l.b16 %v150
    %v190 = vunpack.c.l.b16 %v151
    %v191 = vpack.c.b16 %v176, %v175
    %v192 = vpack.c.b16 %v178, %v177
    %v193 = vpack.c.b16 %v180, %v179
    %v194 = vpack.c.b16 %v182, %v181
    %v195 = vpack.c.b16 %v184, %v183
    %v196 = vpack.c.b16 %v186, %v185
    %v197 = vpack.c.b16 %v188, %v187
    %v198 = vpack.c.b16 %v190, %v189
    %207 = vmatprep.subr.bf16.mxu0 0
    %208 = vmatpush1.bf16.msra.mxu0 %v198
    %209 = vmatprep.subr.bf16.mxu0 0
    %210 = vmatpush1.bf16.msra.mxu0 %v197
    %211 = vmatprep.subr.bf16.mxu0 0
    %212 = vmatpush1.bf16.msra.mxu0 %v196
    %213 = vmatprep.subr.bf16.mxu0 0
    %214 = vmatpush1.bf16.msra.mxu0 %v195
    %215 = vmatprep.subr.bf16.mxu0 0
    %216 = vmatpush1.bf16.msra.mxu0 %v194
    %217 = vmatprep.subr.bf16.mxu0 0
    %218 = vmatpush1.bf16.msra.mxu0 %v193
    %219 = vmatprep.subr.bf16.mxu0 0
    %220 = vmatpush1.bf16.msra.mxu0 %v192
    %221 = vmatprep.subr.bf16.mxu0 0
    %222 = vmatpush1.bf16.msra.mxu0 %v191
    %223 = vmatprep.subr.bf16.mxu0 0
    %224 = vmatpush2.bf16.msra.mxu0 0
    %225 = vmatprep.subr.bf16.mxu0 0
    %226 = vmatpush2.bf16.msra.mxu0 0
    %227 = vmatprep.subr.bf16.mxu0 0
    %228 = vmatpush2.bf16.msra.mxu0 0
    %229 = vmatprep.subr.bf16.mxu0 0
    %230 = vmatpush2.bf16.msra.mxu0 0
    %231 = vmatprep.subr.bf16.mxu0 0
    %232 = vmatpush2.bf16.msra.mxu0 0
    %233 = vmatprep.subr.bf16.mxu0 0
    %234 = vmatpush2.bf16.msra.mxu0 0
    %235 = vmatprep.subr.bf16.mxu0 0
    %236 = vmatpush2.bf16.msra.mxu0 0
    %237 = vmatprep.subr.bf16.mxu0 0
    %238 = vmatpush2.bf16.msra.mxu0 0
    %239 = vmatprep.mubr.bf16.mxu0 0
    %240 = vmatmul.mubr.bf16.gmra.mxu0 %v135
    %v241 = vpop.f32.mrf.mxu0
    %v242 = vadd.f32 %v157, %v241
    %v243 = vpop.f32.mrf.mxu0
    %v244 = vpop.f32.mrf.mxu0
    %v245 = vpop.f32.mrf.mxu0
    %246 = vdwg.mxu0
    %vm247 = vcmask 15360
    %248 = vst.msk [vmem:[%s5] sm:$0xff] %vm247, %v242
    // Predicated region
    $region34: #{gatednet_forward.1} parent=1 // pred_check
      _
    $region35: #{gatednet_forward.1} parent=1 // pred_check_branch
      %250 = sbr.rel (0) target = $region37
    $region36: #{gatednet_forward.1} parent=1 // pred_region
      _
    $region37: #{gatednet_forward.1} parent=1 // pred_fallthru
      _
    // Predicated region
    $region38: #{gatednet_forward.1} parent=1 // pred_check
      _
    $region39: #{gatednet_forward.1} parent=1 // pred_check_branch
      %252 = sbr.rel (0) target = $region41
    $region40: #{gatednet_forward.1} parent=1 // pred_region
      _
    $region41: #{gatednet_forward.1} parent=1 // pred_fallthru
      _
    %253 = vsyncpa [#allocation4], 1
    %254 = vsyncpa [#allocation6], 1

</llo_original>
